<compile_context>
chip_gen: v7x
topology: tpu7x:2x2x1
jax: 0.10.0
libtpu: 0.0.40
codegen_flags: <defaults>
</compile_context>

<pallas_src>
import functools

import jax
import jax.numpy as jnp
from jax.experimental import pallas as pl
from jax.experimental.pallas import tpu as pltpu


IN_DIM = 28 * 28     # 784
H1, H2, H3, OUT = 128, 128, 64, 10


# ----------------------------------------------------------------------------
# Fused MLP kernel: y = W4(relu(W3(relu(W2(relu(W1 x + b1)) + b2)) + b3)) + b4
# bf16 operands on the MXU, f32 accumulation / bias / ReLU.
# ----------------------------------------------------------------------------
def _mlp_kernel(x_ref, w1_ref, b1_ref, w2_ref, b2_ref, w3_ref, b3_ref,
                w4_ref, b4_ref, o_ref):
    x = x_ref[...]                                                   # (TM, 784) bf16
    h = jnp.dot(x, w1_ref[...], preferred_element_type=jnp.float32)
    h = jnp.maximum(h + b1_ref[...], 0.0)                            # (TM, 128) f32
    h = jnp.dot(h.astype(jnp.bfloat16), w2_ref[...],
                preferred_element_type=jnp.float32)
    h = jnp.maximum(h + b2_ref[...], 0.0)                            # (TM, 128) f32
    h = jnp.dot(h.astype(jnp.bfloat16), w3_ref[...],
                preferred_element_type=jnp.float32)
    h = jnp.maximum(h + b3_ref[...], 0.0)                            # (TM, 64) f32
    y = jnp.dot(h.astype(jnp.bfloat16), w4_ref[...],
                preferred_element_type=jnp.float32) + b4_ref[...]
    o_ref[...] = y.astype(o_ref.dtype)                               # (TM, 10)


def _round_up(x, m):
    return ((x + m - 1) // m) * m


def _choose_tile(b, tile_m):
    """Row-tile size: multiple of 8 (or the full batch when b < 8)."""
    if b < 8:
        return b                     # block dims equal full array dims -> legal
    tm = min(tile_m, _round_up(b, 8))
    # If the grid would have a single step but the batch is sizeable, halve the
    # tile so both TensorCores (v7x megacore) get a block.
    if pl.cdiv(b, tm) < 2 and b > 16:
        tm = _round_up(pl.cdiv(b, 2), 8)
    return tm


# ----------------------------------------------------------------------------
# Wrapper
# ----------------------------------------------------------------------------
def mlp_forward(x, params, *, tile_m=2048):
    """x: (B, ...) -> logits (B, 10). Flatten matches torch's x.view(B, -1)."""
    b = x.shape[0]
    x2 = x.reshape(b, -1).astype(jnp.bfloat16)   # bf16 operand for the MXU
    k = x2.shape[1]
    assert k == IN_DIM, f"expected flattened dim {IN_DIM}, got {k}"

    tm = _choose_tile(b, tile_m)
    grid = (pl.cdiv(b, tm),)

    flops_per_row = 2 * (IN_DIM * H1 + H1 * H2 + H2 * H3 + H3 * OUT)
    weight_bytes = 2 * (IN_DIM * H1 + H1 * H2 + H2 * H3 + H3 * OUT) \
        + 4 * (H1 + H2 + H3 + OUT)
    cost = pl.CostEstimate(
        flops=b * flops_per_row,
        transcendentals=0,
        bytes_accessed=2 * b * IN_DIM + 4 * b * OUT + weight_bytes,
    )

    out = pl.pallas_call(
        _mlp_kernel,
        out_shape=jax.ShapeDtypeStruct((b, OUT), jnp.float32),
        grid=grid,
        in_specs=[
            pl.BlockSpec((tm, IN_DIM), lambda i: (i, 0)),   # x tile
            pl.BlockSpec((IN_DIM, H1), lambda i: (0, 0)),   # w1 (resident)
            pl.BlockSpec((1, H1), lambda i: (0, 0)),        # b1
            pl.BlockSpec((H1, H2), lambda i: (0, 0)),       # w2
            pl.BlockSpec((1, H2), lambda i: (0, 0)),        # b2
            pl.BlockSpec((H2, H3), lambda i: (0, 0)),       # w3
            pl.BlockSpec((1, H3), lambda i: (0, 0)),        # b3
            pl.BlockSpec((H3, OUT), lambda i: (0, 0)),      # w4
            pl.BlockSpec((1, OUT), lambda i: (0, 0)),       # b4
        ],
        out_specs=pl.BlockSpec((tm, OUT), lambda i: (i, 0)),
        compiler_params=pltpu.CompilerParams(
            dimension_semantics=("parallel",),              # 2-TC shard on v7x
        ),
        cost_estimate=cost,
    )(x2, params["w1"], params["b1"], params["w2"], params["b2"],
      params["w3"], params["b3"], params["w4"], params["b4"])

    return out


# ----------------------------------------------------------------------------
# Parameter init: weights PRE-TRANSPOSED (in, out) and stored bf16; biases f32.
# ----------------------------------------------------------------------------
def init_params(key):
    ks = jax.random.split(key, 8)

    def uniform(k, shape, fan_in, dtype):
        bound = 1.0 / jnp.sqrt(fan_in)
        return jax.random.uniform(k, shape, jnp.float32, -bound, bound).astype(dtype)

    return {
        "w1": uniform(ks[0], (IN_DIM, H1), IN_DIM, jnp.bfloat16),
        "b1": uniform(ks[1], (1, H1), IN_DIM, jnp.float32),
        "w2": uniform(ks[2], (H1, H2), H1, jnp.bfloat16),
        "b2": uniform(ks[3], (1, H2), H1, jnp.float32),
        "w3": uniform(ks[4], (H2, H3), H2, jnp.bfloat16),
        "b3": uniform(ks[5], (1, H3), H2, jnp.float32),
        "w4": uniform(ks[6], (H3, OUT), H3, jnp.bfloat16),
        "b4": uniform(ks[7], (1, OUT), H3, jnp.float32),
    }


def reference_forward(x, params):
    """Pure-JAX reference with matching bf16-operand / f32-accumulate numerics."""
    h = x.reshape(x.shape[0], -1).astype(jnp.bfloat16)
    h = jnp.maximum(jnp.dot(h, params["w1"],
                            preferred_element_type=jnp.float32) + params["b1"], 0.0)
    h = jnp.maximum(jnp.dot(h.astype(jnp.bfloat16), params["w2"],
                            preferred_element_type=jnp.float32) + params["b2"], 0.0)
    h = jnp.maximum(jnp.dot(h.astype(jnp.bfloat16), params["w3"],
                            preferred_element_type=jnp.float32) + params["b3"], 0.0)
    return jnp.dot(h.astype(jnp.bfloat16), params["w4"],
                   preferred_element_type=jnp.float32) + params["b4"]


if __name__ == "__main__":
    key = jax.random.PRNGKey(0)
    pkey, xkey = jax.random.split(key)
    params = init_params(pkey)

    # Input implied by fc1 (28*28): MNIST-style (N, 1, 28, 28), small batch.
    x = jax.random.normal(xkey, (2, 1, 28, 28), jnp.float32)

    fwd = jax.jit(functools.partial(mlp_forward, tile_m=2048))
    out = jax.block_until_ready(fwd(x, params))

    assert out.shape == (2, 10), out.shape
    ref = reference_forward(x, params)
    assert jnp.allclose(out, ref, atol=2e-2, rtol=2e-2), \
        float(jnp.max(jnp.abs(out - ref)))
    print("KERNEL_OK")
</pallas_src>

<mosaic_0001>
module attributes {stable_mosaic.version = 11 : i64} {
  func.func @_mlp_kernel(%arg0: i32, %arg1: memref<2x784xbf16, #tpu.memory_space<vmem>>, %arg2: memref<784x128xbf16, #tpu.memory_space<vmem>>, %arg3: memref<1x128xf32, #tpu.memory_space<vmem>>, %arg4: memref<128x128xbf16, #tpu.memory_space<vmem>>, %arg5: memref<1x128xf32, #tpu.memory_space<vmem>>, %arg6: memref<128x64xbf16, #tpu.memory_space<vmem>>, %arg7: memref<1x64xf32, #tpu.memory_space<vmem>>, %arg8: memref<64x10xbf16, #tpu.memory_space<vmem>>, %arg9: memref<1x10xf32, #tpu.memory_space<vmem>>, %arg10: memref<2x10xf32, #tpu.memory_space<vmem>>) attributes {dimension_semantics = [#tpu.dimension_semantics<parallel>], iteration_bounds = array<i64: 1>, scalar_prefetch = 0 : i64, scratch_operands = 0 : i64, tpu.core_type = #tpu.core_type<tc>, window_params = [{transform_indices = @transform_0, window_bounds = array<i64: 2, 784>}, {pipeline_mode = #tpu.pipeline_mode<synchronous>, transform_indices = @transform_1, window_bounds = array<i64: 784, 128>}, {pipeline_mode = #tpu.pipeline_mode<synchronous>, transform_indices = @transform_2, window_bounds = array<i64: 1, 128>}, {pipeline_mode = #tpu.pipeline_mode<synchronous>, transform_indices = @transform_3, window_bounds = array<i64: 128, 128>}, {pipeline_mode = #tpu.pipeline_mode<synchronous>, transform_indices = @transform_4, window_bounds = array<i64: 1, 128>}, {pipeline_mode = #tpu.pipeline_mode<synchronous>, transform_indices = @transform_5, window_bounds = array<i64: 128, 64>}, {pipeline_mode = #tpu.pipeline_mode<synchronous>, transform_indices = @transform_6, window_bounds = array<i64: 1, 64>}, {pipeline_mode = #tpu.pipeline_mode<synchronous>, transform_indices = @transform_7, window_bounds = array<i64: 64, 10>}, {pipeline_mode = #tpu.pipeline_mode<synchronous>, transform_indices = @transform_8, window_bounds = array<i64: 1, 10>}, {transform_indices = @transform_9, window_bounds = array<i64: 2, 10>}]} {
    %c0 = arith.constant 0 : index
    %c0_0 = arith.constant 0 : index
    %0 = vector.load %arg1[%c0, %c0_0] : memref<2x784xbf16, #tpu.memory_space<vmem>>, vector<2x784xbf16>
    %c0_1 = arith.constant 0 : index
    %c0_2 = arith.constant 0 : index
    %1 = vector.load %arg2[%c0_1, %c0_2] : memref<784x128xbf16, #tpu.memory_space<vmem>>, vector<784x128xbf16>
    %cst = arith.constant dense<0.000000e+00> : vector<2x128xf32>
    %2 = tpu.matmul %0, %1, %cst {dimension_numbers = #tpu.dot_dimension_numbers<[1], [0], [0], [1], [0, 0, 1, 1], [], []>} : vector<2x784xbf16>, vector<784x128xbf16>, vector<2x128xf32> -> vector<2x128xf32>
    %c0_3 = arith.constant 0 : index
    %c0_4 = arith.constant 0 : index
    %3 = vector.load %arg3[%c0_3, %c0_4] : memref<1x128xf32, #tpu.memory_space<vmem>>, vector<1x128xf32>
    %4 = vector.broadcast %3 : vector<1x128xf32> to vector<2x128xf32>
    %5 = arith.addf %2, %4 : vector<2x128xf32>
    %cst_5 = arith.constant 0.000000e+00 : f32
    %6 = vector.broadcast %cst_5 : f32 to vector<2x128xf32>
    %7 = arith.maximumf %5, %6 : vector<2x128xf32>
    %8 = arith.truncf %7 : vector<2x128xf32> to vector<2x128xbf16>
    %c0_6 = arith.constant 0 : index
    %c0_7 = arith.constant 0 : index
    %9 = vector.load %arg4[%c0_6, %c0_7] : memref<128x128xbf16, #tpu.memory_space<vmem>>, vector<128x128xbf16>
    %cst_8 = arith.constant dense<0.000000e+00> : vector<2x128xf32>
    %10 = tpu.matmul %8, %9, %cst_8 {dimension_numbers = #tpu.dot_dimension_numbers<[1], [0], [0], [1], [0, 0, 1, 1], [], []>} : vector<2x128xbf16>, vector<128x128xbf16>, vector<2x128xf32> -> vector<2x128xf32>
    %c0_9 = arith.constant 0 : index
    %c0_10 = arith.constant 0 : index
    %11 = vector.load %arg5[%c0_9, %c0_10] : memref<1x128xf32, #tpu.memory_space<vmem>>, vector<1x128xf32>
    %12 = vector.broadcast %11 : vector<1x128xf32> to vector<2x128xf32>
    %13 = arith.addf %10, %12 : vector<2x128xf32>
    %cst_11 = arith.constant 0.000000e+00 : f32
    %14 = vector.broadcast %cst_11 : f32 to vector<2x128xf32>
    %15 = arith.maximumf %13, %14 : vector<2x128xf32>
    %16 = arith.truncf %15 : vector<2x128xf32> to vector<2x128xbf16>
    %c0_12 = arith.constant 0 : index
    %c0_13 = arith.constant 0 : index
    %17 = vector.load %arg6[%c0_12, %c0_13] : memref<128x64xbf16, #tpu.memory_space<vmem>>, vector<128x64xbf16>
    %cst_14 = arith.constant dense<0.000000e+00> : vector<2x64xf32>
    %18 = tpu.matmul %16, %17, %cst_14 {dimension_numbers = #tpu.dot_dimension_numbers<[1], [0], [0], [1], [0, 0, 1, 1], [], []>} : vector<2x128xbf16>, vector<128x64xbf16>, vector<2x64xf32> -> vector<2x64xf32>
    %c0_15 = arith.constant 0 : index
    %c0_16 = arith.constant 0 : index
    %19 = vector.load %arg7[%c0_15, %c0_16] : memref<1x64xf32, #tpu.memory_space<vmem>>, vector<1x64xf32>
    %20 = vector.broadcast %19 : vector<1x64xf32> to vector<2x64xf32>
    %21 = arith.addf %18, %20 : vector<2x64xf32>
    %cst_17 = arith.constant 0.000000e+00 : f32
    %22 = vector.broadcast %cst_17 : f32 to vector<2x64xf32>
    %23 = arith.maximumf %21, %22 : vector<2x64xf32>
    %24 = arith.truncf %23 : vector<2x64xf32> to vector<2x64xbf16>
    %c0_18 = arith.constant 0 : index
    %c0_19 = arith.constant 0 : index
    %25 = vector.load %arg8[%c0_18, %c0_19] : memref<64x10xbf16, #tpu.memory_space<vmem>>, vector<64x10xbf16>
    %cst_20 = arith.constant dense<0.000000e+00> : vector<2x10xf32>
    %26 = tpu.matmul %24, %25, %cst_20 {dimension_numbers = #tpu.dot_dimension_numbers<[1], [0], [0], [1], [0, 0, 1, 1], [], []>} : vector<2x64xbf16>, vector<64x10xbf16>, vector<2x10xf32> -> vector<2x10xf32>
    %c0_21 = arith.constant 0 : index
    %c0_22 = arith.constant 0 : index
    %27 = vector.load %arg9[%c0_21, %c0_22] : memref<1x10xf32, #tpu.memory_space<vmem>>, vector<1x10xf32>
    %28 = vector.broadcast %27 : vector<1x10xf32> to vector<2x10xf32>
    %29 = arith.addf %26, %28 : vector<2x10xf32>
    %c0_23 = arith.constant 0 : index
    %c0_24 = arith.constant 0 : index
    %30 = vector.load %arg10[%c0_23, %c0_24] : memref<2x10xf32, #tpu.memory_space<vmem>>, vector<2x10xf32>
    tpu.vector_store %arg10[%c0_23, %c0_24], %29 {strides = array<i32>} : memref<2x10xf32, #tpu.memory_space<vmem>>, vector<2x10xf32>,
    return
  }
  func.func @transform_0(%arg0: i32) -> (i32, i32) {
    %c0_i32 = arith.constant 0 : i32
    %c0_i32_0 = arith.constant 0 : i32
    return %arg0, %c0_i32 : i32, i32
  }
  func.func @transform_1(%arg0: i32) -> (i32, i32) {
    %c0_i32 = arith.constant 0 : i32
    %c0_i32_0 = arith.constant 0 : i32
    %c0_i32_1 = arith.constant 0 : i32
    return %c0_i32, %c0_i32_0 : i32, i32
  }
  func.func @transform_2(%arg0: i32) -> (i32, i32) {
    %c0_i32 = arith.constant 0 : i32
    %c0_i32_0 = arith.constant 0 : i32
    %c0_i32_1 = arith.constant 0 : i32
    return %c0_i32, %c0_i32_0 : i32, i32
  }
  func.func @transform_3(%arg0: i32) -> (i32, i32) {
    %c0_i32 = arith.constant 0 : i32
    %c0_i32_0 = arith.constant 0 : i32
    %c0_i32_1 = arith.constant 0 : i32
    return %c0_i32, %c0_i32_0 : i32, i32
  }
  func.func @transform_4(%arg0: i32) -> (i32, i32) {
    %c0_i32 = arith.constant 0 : i32
    %c0_i32_0 = arith.constant 0 : i32
    %c0_i32_1 = arith.constant 0 : i32
    return %c0_i32, %c0_i32_0 : i32, i32
  }
  func.func @transform_5(%arg0: i32) -> (i32, i32) {
    %c0_i32 = arith.constant 0 : i32
    %c0_i32_0 = arith.constant 0 : i32
    %c0_i32_1 = arith.constant 0 : i32
    return %c0_i32, %c0_i32_0 : i32, i32
  }
  func.func @transform_6(%arg0: i32) -> (i32, i32) {
    %c0_i32 = arith.constant 0 : i32
    %c0_i32_0 = arith.constant 0 : i32
    %c0_i32_1 = arith.constant 0 : i32
    return %c0_i32, %c0_i32_0 : i32, i32
  }
  func.func @transform_7(%arg0: i32) -> (i32, i32) {
    %c0_i32 = arith.constant 0 : i32
    %c0_i32_0 = arith.constant 0 : i32
    %c0_i32_1 = arith.constant 0 : i32
    return %c0_i32, %c0_i32_0 : i32, i32
  }
  func.func @transform_8(%arg0: i32) -> (i32, i32) {
    %c0_i32 = arith.constant 0 : i32
    %c0_i32_0 = arith.constant 0 : i32
    %c0_i32_1 = arith.constant 0 : i32
    return %c0_i32, %c0_i32_0 : i32, i32
  }
  func.func @transform_9(%arg0: i32) -> (i32, i32) {
    %c0_i32 = arith.constant 0 : i32
    %c0_i32_0 = arith.constant 0 : i32
    return %arg0, %c0_i32 : i32, i32
  }
}

</mosaic_0001>

<llo_original>
// kernel: mlp_forward.1
$region0: #{mlp_forward.1}
  #allocation0 [shape = 'u32[]', space=smem, size = 0x4, offset = 0x4, fixed_abs, tag = 'smem constant byte address 0x4 - core index']
  #allocation1 [shape = 'u32[144,128]{1,0:T(1,128)}', space=vmem, size = 0x12000, scoped, tag = 'internal scratch']
  %s0 = inlined_call_operand.vmem [shape: bf16[2,784], index: 0, kind: input, shape index: {}]
  %s1 = inlined_call_operand.hbm [shape: bf16[784,128], index: 1, kind: input, shape index: {}]
  %s2 = inlined_call_operand.vmem [shape: f32[1,128], index: 2, kind: input, shape index: {}]
  %s3 = inlined_call_operand.vmem [shape: bf16[128,128], index: 3, kind: input, shape index: {}]
  %s4 = inlined_call_operand.vmem [shape: f32[1,128], index: 4, kind: input, shape index: {}]
  %s5 = inlined_call_operand.vmem [shape: bf16[128,64], index: 5, kind: input, shape index: {}]
  %s6 = inlined_call_operand.vmem [shape: f32[1,64], index: 6, kind: input, shape index: {}]
  %s7 = inlined_call_operand.vmem [shape: bf16[64,10], index: 7, kind: input, shape index: {}]
  %s8 = inlined_call_operand.vmem [shape: f32[1,10], index: 8, kind: input, shape index: {}]
  %s9 = inlined_call_operand.hbm [shape: f32[2,10], index: 9, kind: output, shape index: {}]
  %s10 = sld [smem:[#allocation0]]
  $region50: #{mlp_forward.1} parent=0
    _
  %s12 = ssub.s32 1, %s10
  %s13 = scalar_select 0, %s12, %s10
  $region1: #{mlp_forward.1} parent=0
    #allocation2 [shape = 'u8[200704]{0}', space=vmem, size = 0x31000, scoped, tag = 'input window, operand 1, single buffered']
    #allocation3 [shape = 's32[1]{0}', space=sflag, size = 0x4, scoped, tag = 'scoped memory for mlp_forward.1']
    #allocation4 [shape = 's32[1]{0}', space=sflag, size = 0x4, scoped, tag = 'scoped memory for mlp_forward.1']
    #allocation5 [shape = 'u8[1024]{0}', space=vmem, size = 0x400, scoped, tag = 'output window, operand 0, single buffered']
    %14 = vsyncpa [#allocation3], 0
    %15 = vsyncpa [#allocation4], 0
    // Predicated region
    $region2: #{mlp_forward.1} parent=1 // pred_check
      _
    $region3: #{mlp_forward.1} parent=1 // pred_check_branch
      %17 = sbr.rel (0) target = $region5
    $region4: #{mlp_forward.1} parent=1 // pred_region
      _
    $region5: #{mlp_forward.1} parent=1 // pred_fallthru
      _
    // Predicated region
    $region6: #{mlp_forward.1} parent=1 // pred_check
      _
    $region7: #{mlp_forward.1} parent=1 // pred_check_branch
      %19 = sbr.rel (0) target = $region9
    $region8: #{mlp_forward.1} parent=1 // pred_region
      %s21 = ssub.s32 6272, 6272
      %22 = vsyncadd [#allocation3], %s21
      %s23 = sshll.u32 [#allocation2], 4
      %s24 = int_to_ptr.vmem [resolvable:$true] %s23
      %29 = dma.hbm_to_vmem [thread:$0]  %s1, 6272, %s24, [#allocation3], 64, 64, 4
    $region9: #{mlp_forward.1} parent=1 // pred_fallthru
      _
    // Predicated region
    $region10: #{mlp_forward.1} parent=1 // pred_check
      _
    $region11: #{mlp_forward.1} parent=1 // pred_check_branch
      %31 = sbr.rel (0) target = $region13
    $region12: #{mlp_forward.1} parent=1 // pred_region
      _
    $region13: #{mlp_forward.1} parent=1 // pred_fallthru
      _
    // Predicated region
    $region14: #{mlp_forward.1} parent=1 // pred_check
      _
    $region15: #{mlp_forward.1} parent=1 // pred_check_branch
      %33 = sbr.rel (0) target = $region17
    $region16: #{mlp_forward.1} parent=1 // pred_region
      _
    $region17: #{mlp_forward.1} parent=1 // pred_fallthru
      _
    // Predicated region
    $region18: #{mlp_forward.1} parent=1 // pred_check
      _
    $region19: #{mlp_forward.1} parent=1 // pred_check_branch
      %35 = sbr.rel (0) target = $region21
    $region20: #{mlp_forward.1} parent=1 // pred_region
      _
    $region21: #{mlp_forward.1} parent=1 // pred_fallthru
      _
    // Predicated region
    $region22: #{mlp_forward.1} parent=1 // pred_check
      _
    $region23: #{mlp_forward.1} parent=1 // pred_check_branch
      %37 = sbr.rel (0) target = $region25
    $region24: #{mlp_forward.1} parent=1 // pred_region
      _
    $region25: #{mlp_forward.1} parent=1 // pred_fallthru
      _
    // Predicated region
    $region26: #{mlp_forward.1} parent=1 // pred_check
      _
    $region27: #{mlp_forward.1} parent=1 // pred_check_branch
      %39 = sbr.rel (0) target = $region29
    $region28: #{mlp_forward.1} parent=1 // pred_region
      _
    $region29: #{mlp_forward.1} parent=1 // pred_fallthru
      _
    // Predicated region
    $region30: #{mlp_forward.1} parent=1 // pred_check
      _
    $region31: #{mlp_forward.1} parent=1 // pred_check_branch
      %41 = sbr.rel (0) target = $region33
    $region32: #{mlp_forward.1} parent=1 // pred_region
      _
    $region33: #{mlp_forward.1} parent=1 // pred_fallthru
      _
    // Predicated region
    $region34: #{mlp_forward.1} parent=1 // pred_check
      _
    $region35: #{mlp_forward.1} parent=1 // pred_check_branch
      %43 = sbr.rel (0) target = $region37
    $region36: #{mlp_forward.1} parent=1 // pred_region
      _
    $region37: #{mlp_forward.1} parent=1 // pred_fallthru
      _
    // Predicated region
    $region38: #{mlp_forward.1} parent=1 // pred_check
      _
    $region39: #{mlp_forward.1} parent=1 // pred_check_branch
      %45 = sbr.rel (0) target = $region41
    $region40: #{mlp_forward.1} parent=1 // pred_region
      %46 = dma.done [#allocation3], 6272
    $region41: #{mlp_forward.1} parent=1 // pred_fallthru
      _
    %v48 = vld [vmem:[%s0] sm:$0x7f]
    %v49 = vld [vmem:[#allocation2] sm:$0xf]
    %v50 = vld [vmem:[#allocation2 + $0x4] sm:$0xf]
    %v51 = vld [vmem:[#allocation2 + $0x8] sm:$0xf]
    %v52 = vld [vmem:[#allocation2 + $0xc] sm:$0xf]
    %v53 = vld [vmem:[#allocation2 + $0x10] sm:$0xf]
    %v54 = vld [vmem:[#allocation2 + $0x14] sm:$0xf]
    %v55 = vld [vmem:[#allocation2 + $0x18] sm:$0xf]
    %v56 = vld [vmem:[#allocation2 + $0x1c] sm:$0xf]
    %v57 = vld [vmem:[#allocation2 + $0x20] sm:$0xf]
    %v58 = vld [vmem:[#allocation2 + $0x24] sm:$0xf]
    %v59 = vld [vmem:[#allocation2 + $0x28] sm:$0xf]
    %v60 = vld [vmem:[#allocation2 + $0x2c] sm:$0xf]
    %v61 = vld [vmem:[#allocation2 + $0x30] sm:$0xf]
    %v62 = vld [vmem:[#allocation2 + $0x34] sm:$0xf]
    %v63 = vld [vmem:[#allocation2 + $0x38] sm:$0xf]
    %v64 = vld [vmem:[#allocation2 + $0x3c] sm:$0xf]
    %v65 = vld [vmem:[#allocation2 + $0x40] sm:$0xf]
    %v66 = vld [vmem:[#allocation2 + $0x44] sm:$0xf]
    %v67 = vld [vmem:[#allocation2 + $0x48] sm:$0xf]
    %v68 = vld [vmem:[#allocation2 + $0x4c] sm:$0xf]
    %v69 = vld [vmem:[#allocation2 + $0x50] sm:$0xf]
    %v70 = vld [vmem:[#allocation2 + $0x54] sm:$0xf]
    %v71 = vld [vmem:[#allocation2 + $0x58] sm:$0xf]
    %v72 = vld [vmem:[#allocation2 + $0x5c] sm:$0xf]
    %v73 = vld [vmem:[#allocation2 + $0x60] sm:$0xf]
    %v74 = vld [vmem:[#allocation2 + $0x64] sm:$0xf]
    %v75 = vld [vmem:[#allocation2 + $0x68] sm:$0xf]
    %v76 = vld [vmem:[#allocation2 + $0x6c] sm:$0xf]
    %v77 = vld [vmem:[#allocation2 + $0x70] sm:$0xf]
    %v78 = vld [vmem:[#allocation2 + $0x74] sm:$0xf]
    %v79 = vld [vmem:[#allocation2 + $0x78] sm:$0xf]
    %v80 = vld [vmem:[#allocation2 + $0x7c] sm:$0xf]
    %v81 = vld [vmem:[#allocation2 + $0x80] sm:$0xf]
    %v82 = vld [vmem:[#allocation2 + $0x84] sm:$0xf]
    %v83 = vld [vmem:[#allocation2 + $0x88] sm:$0xf]
    %v84 = vld [vmem:[#allocation2 + $0x8c] sm:$0xf]
    %v85 = vld [vmem:[#allocation2 + $0x90] sm:$0xf]
    %v86 = vld [vmem:[#allocation2 + $0x94] sm:$0xf]
    %v87 = vld [vmem:[#allocation2 + $0x98] sm:$0xf]
    %v88 = vld [vmem:[#allocation2 + $0x9c] sm:$0xf]
    %v89 = vld [vmem:[#allocation2 + $0xa0] sm:$0xf]
    %v90 = vld [vmem:[#allocation2 + $0xa4] sm:$0xf]
    %v91 = vld [vmem:[#allocation2 + $0xa8] sm:$0xf]
    %v92 = vld [vmem:[#allocation2 + $0xac] sm:$0xf]
    %v93 = vld [vmem:[#allocation2 + $0xb0] sm:$0xf]
    %v94 = vld [vmem:[#allocation2 + $0xb4] sm:$0xf]
    %v95 = vld [vmem:[#allocation2 + $0xb8] sm:$0xf]
    %v96 = vld [vmem:[#allocation2 + $0xbc] sm:$0xf]
    %v97 = vld [vmem:[#allocation2 + $0xc0] sm:$0xf]
    %v98 = vld [vmem:[#allocation2 + $0xc4] sm:$0xf]
    %v99 = vld [vmem:[#allocation2 + $0xc8] sm:$0xf]
    %v100 = vld [vmem:[#allocation2 + $0xcc] sm:$0xf]
    %v101 = vld [vmem:[#allocation2 + $0xd0] sm:$0xf]
    %v102 = vld [vmem:[#allocation2 + $0xd4] sm:$0xf]
    %v103 = vld [vmem:[#allocation2 + $0xd8] sm:$0xf]
    %v104 = vld [vmem:[#allocation2 + $0xdc] sm:$0xf]
    %v105 = vld [vmem:[#allocation2 + $0xe0] sm:$0xf]
    %v106 = vld [vmem:[#allocation2 + $0xe4] sm:$0xf]
    %v107 = vld [vmem:[#allocation2 + $0xe8] sm:$0xf]
    %v108 = vld [vmem:[#allocation2 + $0xec] sm:$0xf]
    %v109 = vld [vmem:[#allocation2 + $0xf0] sm:$0xf]
    %v110 = vld [vmem:[#allocation2 + $0xf4] sm:$0xf]
    %v111 = vld [vmem:[#allocation2 + $0xf8] sm:$0xf]
    %v112 = vld [vmem:[#allocation2 + $0xfc] sm:$0xf]
    %v113 = vld [vmem:[#allocation2 + $0x100] sm:$0xf]
    %v114 = vld [vmem:[#allocation2 + $0x104] sm:$0xf]
    %v115 = vld [vmem:[#allocation2 + $0x108] sm:$0xf]
    %v116 = vld [vmem:[#allocation2 + $0x10c] sm:$0xf]
    %v117 = vld [vmem:[#allocation2 + $0x110] sm:$0xf]
    %v118 = vld [vmem:[#allocation2 + $0x114] sm:$0xf]
    %v119 = vld [vmem:[#allocation2 + $0x118] sm:$0xf]
    %v120 = vld [vmem:[#allocation2 + $0x11c] sm:$0xf]
    %v121 = vld [vmem:[#allocation2 + $0x120] sm:$0xf]
    %v122 = vld [vmem:[#allocation2 + $0x124] sm:$0xf]
    %v123 = vld [vmem:[#allocation2 + $0x128] sm:$0xf]
    %v124 = vld [vmem:[#allocation2 + $0x12c] sm:$0xf]
    %v125 = vld [vmem:[#allocation2 + $0x130] sm:$0xf]
    %v126 = vld [vmem:[#allocation2 + $0x134] sm:$0xf]
    %v127 = vld [vmem:[#allocation2 + $0x138] sm:$0xf]
    %v128 = vld [vmem:[#allocation2 + $0x13c] sm:$0xf]
    %v129 = vld [vmem:[#allocation2 + $0x140] sm:$0xf]
    %v130 = vld [vmem:[#allocation2 + $0x144] sm:$0xf]
    %v131 = vld [vmem:[#allocation2 + $0x148] sm:$0xf]
    %v132 = vld [vmem:[#allocation2 + $0x14c] sm:$0xf]
    %v133 = vld [vmem:[#allocation2 + $0x150] sm:$0xf]
    %v134 = vld [vmem:[#allocation2 + $0x154] sm:$0xf]
    %v135 = vld [vmem:[#allocation2 + $0x158] sm:$0xf]
    %v136 = vld [vmem:[#allocation2 + $0x15c] sm:$0xf]
    %v137 = vld [vmem:[#allocation2 + $0x160] sm:$0xf]
    %v138 = vld [vmem:[#allocation2 + $0x164] sm:$0xf]
    %v139 = vld [vmem:[#allocation2 + $0x168] sm:$0xf]
    %v140 = vld [vmem:[#allocation2 + $0x16c] sm:$0xf]
    %v141 = vld [vmem:[#allocation2 + $0x170] sm:$0xf]
    %v142 = vld [vmem:[#allocation2 + $0x174] sm:$0xf]
    %v143 = vld [vmem:[#allocation2 + $0x178] sm:$0xf]
    %v144 = vld [vmem:[#allocation2 + $0x17c] sm:$0xf]
    %v145 = vld [vmem:[#allocation2 + $0x180] sm:$0xf]
    %v146 = vld [vmem:[#allocation2 + $0x184] sm:$0xf]
    %v147 = vld [vmem:[%s2] sm:$0x1]
    %v149 = vlaneseq
    %v150 = vshrl.u32 %v149, 7
    %v151 = vsub.s32 0, %v150
    %v152 = vrot.slane %v147, %v151
    %v155 = vcombine.high %v48, %v48
    %v157 = vunpack.c.l.s4 1966171168
    %v158 = vunpack.c.0.s8 %v157
    %v159 = vlaneseq
    %v160 = vshrl.u32 %v159, 7
    %v161 = vsub.s32 %v158, %v160
    %v162 = vrot.slane %v48, %v161
    %v164 = vunpack.c.l.s4 1966171168
    %v165 = vunpack.c.0.s8 %v164
    %v166 = vlaneseq
    %v167 = vshrl.u32 %v166, 7
    %v168 = vsub.s32 %v165, %v167
    %v169 = vrot.slane %v155, %v168
    %v170 = vcombine.high %v162, %v162
    %v171 = vcombine.high %v169, %v169
    %v173 = vunpack.c.l.s4 1966171168
    %v174 = vunpack.c.0.s8 %v173
    %v175 = vlaneseq
    %v176 = vshrl.u32 %v175, 7
    %v177 = vsub.s32 %v174, %v176
    %v178 = vrot.slane %v162, %v177
    %v180 = vunpack.c.l.s4 1966171168
    %v181 = vunpack.c.0.s8 %v180
    %v182 = vlaneseq
    %v183 = vshrl.u32 %v182, 7
    %v184 = vsub.s32 %v181, %v183
    %v185 = vrot.slane %v169, %v184
    %v187 = vunpack.c.l.s4 1966171168
    %v188 = vunpack.c.0.s8 %v187
    %v189 = vlaneseq
    %v190 = vshrl.u32 %v189, 7
    %v191 = vsub.s32 %v188, %v190
    %v192 = vrot.slane %v170, %v191
    %v194 = vunpack.c.l.s4 1966171168
    %v195 = vunpack.c.0.s8 %v194
    %v196 = vlaneseq
    %v197 = vshrl.u32 %v196, 7
    %v198 = vsub.s32 %v195, %v197
    %v199 = vrot.slane %v171, %v198
    %v200 = vcombine.high %v178, %v178
    %v201 = vcombine.high %v185, %v185
    %v202 = vcombine.high %v192, %v192
    %v307 = vunpack.c.l.b16 %v49
    %v308 = vunpack.c.l.b16 %v50
    %v309 = vunpack.c.l.b16 %v51
    %v310 = vunpack.c.l.b16 %v52
    %v311 = vunpack.c.l.b16 %v53
    %v312 = vunpack.c.l.b16 %v54
    %v313 = vunpack.c.l.b16 %v55
    %v314 = vunpack.c.l.b16 %v56
    %v315 = vunpack.c.l.b16 %v57
    %v316 = vunpack.c.l.b16 %v58
    %v317 = vunpack.c.l.b16 %v59
    %v318 = vunpack.c.l.b16 %v60
    %v319 = vunpack.c.l.b16 %v61
    %v320 = vunpack.c.l.b16 %v62
    %v321 = vunpack.c.l.b16 %v63
    %v322 = vunpack.c.l.b16 %v64
    %v323 = vunpack.c.l.b16 %v65
    %v324 = vunpack.c.l.b16 %v66
    %v325 = vunpack.c.l.b16 %v67
    %v326 = vunpack.c.l.b16 %v68
    %v327 = vunpack.c.l.b16 %v69
    %v328 = vunpack.c.l.b16 %v70
    %v329 = vunpack.c.l.b16 %v71
    %v330 = vunpack.c.l.b16 %v72
    %v331 = vunpack.c.l.b16 %v73
    %v332 = vunpack.c.l.b16 %v74
    %v333 = vunpack.c.l.b16 %v75
    %v334 = vunpack.c.l.b16 %v76
    %v335 = vunpack.c.l.b16 %v77
    %v336 = vunpack.c.l.b16 %v78
    %v337 = vunpack.c.l.b16 %v79
    %v338 = vunpack.c.l.b16 %v80
    %v339 = vunpack.c.l.b16 %v81
    %v340 = vunpack.c.l.b16 %v82
    %v341 = vunpack.c.l.b16 %v83
    %v342 = vunpack.c.l.b16 %v84
    %v343 = vunpack.c.l.b16 %v85
    %v344 = vunpack.c.l.b16 %v86
    %v345 = vunpack.c.l.b16 %v87
    %v346 = vunpack.c.l.b16 %v88
    %v347 = vunpack.c.l.b16 %v89
    %v348 = vunpack.c.l.b16 %v90
    %v349 = vunpack.c.l.b16 %v91
    %v350 = vunpack.c.l.b16 %v92
    %v351 = vunpack.c.l.b16 %v93
    %v352 = vunpack.c.l.b16 %v94
    %v353 = vunpack.c.l.b16 %v95
    %v354 = vunpack.c.l.b16 %v96
    %v355 = vunpack.c.l.b16 %v97
    %v356 = vunpack.c.l.b16 %v98
    %v357 = vunpack.c.l.b16 %v99
    %v358 = vunpack.c.l.b16 %v100
    %v359 = vunpack.c.l.b16 %v101
    %v360 = vunpack.c.l.b16 %v102
    %v361 = vunpack.c.l.b16 %v103
    %v362 = vunpack.c.l.b16 %v104
    %v363 = vunpack.c.l.b16 %v105
    %v364 = vunpack.c.l.b16 %v106
    %v365 = vunpack.c.l.b16 %v107
    %v366 = vunpack.c.l.b16 %v108
    %v367 = vunpack.c.l.b16 %v109
    %v368 = vunpack.c.l.b16 %v110
    %v369 = vunpack.c.l.b16 %v111
    %v370 = vunpack.c.l.b16 %v112
    %v371 = vunpack.c.l.b16 %v113
    %v372 = vunpack.c.l.b16 %v114
    %v373 = vunpack.c.l.b16 %v115
    %v374 = vunpack.c.l.b16 %v116
    %v375 = vunpack.c.l.b16 %v117
    %v376 = vunpack.c.l.b16 %v118
    %v377 = vunpack.c.l.b16 %v119
    %v378 = vunpack.c.l.b16 %v120
    %v379 = vunpack.c.l.b16 %v121
    %v380 = vunpack.c.l.b16 %v122
    %v381 = vunpack.c.l.b16 %v123
    %v382 = vunpack.c.l.b16 %v124
    %v383 = vunpack.c.l.b16 %v125
    %v384 = vunpack.c.l.b16 %v126
    %v385 = vunpack.c.l.b16 %v127
    %v386 = vunpack.c.l.b16 %v128
    %v387 = vunpack.c.l.b16 %v129
    %v388 = vunpack.c.l.b16 %v130
    %v389 = vunpack.c.l.b16 %v131
    %v390 = vunpack.c.l.b16 %v132
    %v391 = vunpack.c.l.b16 %v133
    %v392 = vunpack.c.l.b16 %v134
    %v393 = vunpack.c.l.b16 %v135
    %v394 = vunpack.c.l.b16 %v136
    %v395 = vunpack.c.l.b16 %v137
    %v396 = vunpack.c.l.b16 %v138
    %v397 = vunpack.c.l.b16 %v139
    %v398 = vunpack.c.l.b16 %v140
    %v399 = vunpack.c.l.b16 %v141
    %v400 = vunpack.c.l.b16 %v142
    %v401 = vunpack.c.l.b16 %v143
    %v402 = vunpack.c.l.b16 %v144
    %v403 = vunpack.c.l.b16 %v145
    %v404 = vunpack.c.l.b16 %v146
    %v405 = vpack.c.b16 %v308, %v307
    %v406 = vpack.c.b16 %v310, %v309
    %v407 = vpack.c.b16 %v312, %v311
    %v408 = vpack.c.b16 %v314, %v313
    %v409 = vpack.c.b16 %v316, %v315
    %v410 = vpack.c.b16 %v318, %v317
    %v411 = vpack.c.b16 %v320, %v319
    %v412 = vpack.c.b16 %v322, %v321
    %v413 = vpack.c.b16 %v324, %v323
    %v414 = vpack.c.b16 %v326, %v325
    %v415 = vpack.c.b16 %v328, %v327
    %v416 = vpack.c.b16 %v330, %v329
    %v417 = vpack.c.b16 %v332, %v331
    %v418 = vpack.c.b16 %v334, %v333
    %v419 = vpack.c.b16 %v336, %v335
    %v420 = vpack.c.b16 %v338, %v337
    %v421 = vpack.c.b16 %v340, %v339
    %v422 = vpack.c.b16 %v342, %v341
    %v423 = vpack.c.b16 %v344, %v343
    %v424 = vpack.c.b16 %v346, %v345
    %v425 = vpack.c.b16 %v348, %v347
    %v426 = vpack.c.b16 %v350, %v349
    %v427 = vpack.c.b16 %v352, %v351
    %v428 = vpack.c.b16 %v354, %v353
    %v429 = vpack.c.b16 %v356, %v355
    %v430 = vpack.c.b16 %v358, %v357
    %v431 = vpack.c.b16 %v360, %v359
    %v432 = vpack.c.b16 %v362, %v361
    %v433 = vpack.c.b16 %v364, %v363
    %v434 = vpack.c.b16 %v366, %v365
    %v435 = vpack.c.b16 %v368, %v367
    %v436 = vpack.c.b16 %v370, %v369
    %v437 = vpack.c.b16 %v372, %v371
    %v438 = vpack.c.b16 %v374, %v373
    %v439 = vpack.c.b16 %v376, %v375
    %v440 = vpack.c.b16 %v378, %v377
    %v441 = vpack.c.b16 %v380, %v379
    %v442 = vpack.c.b16 %v382, %v381
    %v443 = vpack.c.b16 %v384, %v383
    %v444 = vpack.c.b16 %v386, %v385
    %v445 = vpack.c.b16 %v388, %v387
    %v446 = vpack.c.b16 %v390, %v389
    %v447 = vpack.c.b16 %v392, %v391
    %v448 = vpack.c.b16 %v394, %v393
    %v449 = vpack.c.b16 %v396, %v395
    %v450 = vpack.c.b16 %v398, %v397
    %v451 = vpack.c.b16 %v400, %v399
    %v452 = vpack.c.b16 %v402, %v401
    %v453 = vpack.c.b16 %v404, %v403
    %vm503 = vcmask 130048
    %v505 = vsel %vm503, %v201, 0
    %507 = vmatprep.subr.bf16.mxu0 0
    %508 = vmatpush1.bf16.msra.mxu0 %v405
    %509 = vmatprep.subr.bf16.mxu0 0
    %510 = vmatpush1.bf16.msra.mxu0 %v406
    %511 = vmatprep.subr.bf16.mxu0 0
    %512 = vmatpush1.bf16.msra.mxu0 %v407
    %513 = vmatprep.subr.bf16.mxu0 0
    %514 = vmatpush1.bf16.msra.mxu0 %v408
    %515 = vmatprep.subr.bf16.mxu0 0
    %516 = vmatpush1.bf16.msra.mxu0 %v409
    %517 = vmatprep.subr.bf16.mxu0 0
    %518 = vmatpush1.bf16.msra.mxu0 %v410
    %519 = vmatprep.subr.bf16.mxu0 0
    %520 = vmatpush1.bf16.msra.mxu0 %v411
    %521 = vmatprep.subr.bf16.mxu0 0
    %522 = vmatpush1.bf16.msra.mxu0 %v412
    %523 = vmatprep.subr.bf16.mxu0 0
    %524 = vmatpush1.bf16.msra.mxu0 %v413
    %525 = vmatprep.subr.bf16.mxu0 0
    %526 = vmatpush1.bf16.msra.mxu0 %v414
    %527 = vmatprep.subr.bf16.mxu0 0
    %528 = vmatpush1.bf16.msra.mxu0 %v415
    %529 = vmatprep.subr.bf16.mxu0 0
    %530 = vmatpush1.bf16.msra.mxu0 %v416
    %531 = vmatprep.subr.bf16.mxu0 0
    %532 = vmatpush1.bf16.msra.mxu0 %v417
    %533 = vmatprep.subr.bf16.mxu0 0
    %534 = vmatpush1.bf16.msra.mxu0 %v418
    %535 = vmatprep.subr.bf16.mxu0 0
    %536 = vmatpush1.bf16.msra.mxu0 %v419
    %537 = vmatprep.subr.bf16.mxu0 0
    %538 = vmatpush1.bf16.msra.mxu0 %v420
    %539 = vmatprep.mubr.bf16.mxu0 %v192
    %540 = vmatmul.mubr.bf16.gmra.mrb[0].mxu0 %v178
    %v541 = vpop.f32.mrb[0].mxu0
    %v542 = vadd.f32 %v152, %v541
    %v543 = vpop.f32.mrb[0].mxu0
    %v544 = vpop.f32.mrb[0].mxu0
    %v545 = vpop.f32.mrb[0].mxu0
    %546 = vdwg.mxu0
    %547 = vmatprep.subr.bf16.mxu0 0
    %548 = vmatpush1.bf16.msra.mxu0 %v421
    %549 = vmatprep.subr.bf16.mxu0 0
    %550 = vmatpush1.bf16.msra.mxu0 %v422
    %551 = vmatprep.subr.bf16.mxu0 0
    %552 = vmatpush1.bf16.msra.mxu0 %v423
    %553 = vmatprep.subr.bf16.mxu0 0
    %554 = vmatpush1.bf16.msra.mxu0 %v424
    %555 = vmatprep.subr.bf16.mxu0 0
    %556 = vmatpush1.bf16.msra.mxu0 %v425
    %557 = vmatprep.subr.bf16.mxu0 0
    %558 = vmatpush1.bf16.msra.mxu0 %v426
    %559 = vmatprep.subr.bf16.mxu0 0
    %560 = vmatpush1.bf16.msra.mxu0 %v427
    %561 = vmatprep.subr.bf16.mxu0 0
    %562 = vmatpush1.bf16.msra.mxu0 %v428
    %563 = vmatprep.subr.bf16.mxu0 0
    %564 = vmatpush1.bf16.msra.mxu0 %v429
    %565 = vmatprep.subr.bf16.mxu0 0
    %566 = vmatpush1.bf16.msra.mxu0 %v430
    %567 = vmatprep.subr.bf16.mxu0 0
    %568 = vmatpush1.bf16.msra.mxu0 %v431
    %569 = vmatprep.subr.bf16.mxu0 0
    %570 = vmatpush1.bf16.msra.mxu0 %v432
    %571 = vmatprep.subr.bf16.mxu0 0
    %572 = vmatpush1.bf16.msra.mxu0 %v433
    %573 = vmatprep.subr.bf16.mxu0 0
    %574 = vmatpush1.bf16.msra.mxu0 %v434
    %575 = vmatprep.subr.bf16.mxu0 0
    %576 = vmatpush1.bf16.msra.mxu0 %v435
    %577 = vmatprep.subr.bf16.mxu0 0
    %578 = vmatpush1.bf16.msra.mxu0 %v436
    %579 = vmatprep.mubr.bf16.mxu0 %v202
    %580 = vmatmul.mubr.bf16.gmra.mrb[0].mxu0 %v200
    %v581 = vpop.f32.mrb[0].mxu0
    %v582 = vadd.f32 %v542, %v581
    %v583 = vpop.f32.mrb[0].mxu0
    %v584 = vpop.f32.mrb[0].mxu0
    %v585 = vpop.f32.mrb[0].mxu0
    %586 = vdwg.mxu0
    %587 = vmatprep.subr.bf16.mxu0 0
    %588 = vmatpush1.bf16.msra.mxu0 %v437
    %589 = vmatprep.subr.bf16.mxu0 0
    %590 = vmatpush1.bf16.msra.mxu0 %v438
    %591 = vmatprep.subr.bf16.mxu0 0
    %592 = vmatpush1.bf16.msra.mxu0 %v439
    %593 = vmatprep.subr.bf16.mxu0 0
    %594 = vmatpush1.bf16.msra.mxu0 %v440
    %595 = vmatprep.subr.bf16.mxu0 0
    %596 = vmatpush1.bf16.msra.mxu0 %v441
    %597 = vmatprep.subr.bf16.mxu0 0
    %598 = vmatpush1.bf16.msra.mxu0 %v442
    %599 = vmatprep.subr.bf16.mxu0 0
    %600 = vmatpush1.bf16.msra.mxu0 %v443
    %601 = vmatprep.subr.bf16.mxu0 0
    %602 = vmatpush1.bf16.msra.mxu0 %v444
    %603 = vmatprep.subr.bf16.mxu0 0
    %604 = vmatpush1.bf16.msra.mxu0 %v445
    %605 = vmatprep.subr.bf16.mxu0 0
    %606 = vmatpush1.bf16.msra.mxu0 %v446
    %607 = vmatprep.subr.bf16.mxu0 0
    %608 = vmatpush1.bf16.msra.mxu0 %v447
    %609 = vmatprep.subr.bf16.mxu0 0
    %610 = vmatpush1.bf16.msra.mxu0 %v448
    %611 = vmatprep.subr.bf16.mxu0 0
    %612 = vmatpush1.bf16.msra.mxu0 %v449
    %613 = vmatprep.subr.bf16.mxu0 0
    %614 = vmatpush1.bf16.msra.mxu0 %v450
    %615 = vmatprep.subr.bf16.mxu0 0
    %616 = vmatpush1.bf16.msra.mxu0 %v451
    %617 = vmatprep.subr.bf16.mxu0 0
    %618 = vmatpush1.bf16.msra.mxu0 %v452
    %619 = vmatprep.mubr.bf16.mxu0 %v199
    %620 = vmatmul.mubr.bf16.gmra.mrb[0].mxu0 %v185
    %v621 = vpop.f32.mrb[0].mxu0
    %v622 = vadd.f32 %v582, %v621
    %v623 = vpop.f32.mrb[0].mxu0
    %v624 = vpop.f32.mrb[0].mxu0
    %v625 = vpop.f32.mrb[0].mxu0
    %626 = vdwg.mxu0
    %627 = vmatprep.subr.bf16.mxu0 0
    %628 = vmatpush1.bf16.msra.mxu0 %v453
    %629 = vmatprep.subr.bf16.mxu0 0
    %630 = vmatpush1.bf16.msra.mxu0 0
    %631 = vmatprep.subr.bf16.mxu0 0
    %632 = vmatpush1.bf16.msra.mxu0 0
    %633 = vmatprep.subr.bf16.mxu0 0
    %634 = vmatpush1.bf16.msra.mxu0 0
    %635 = vmatprep.subr.bf16.mxu0 0
    %636 = vmatpush1.bf16.msra.mxu0 0
    %637 = vmatprep.subr.bf16.mxu0 0
    %638 = vmatpush1.bf16.msra.mxu0 0
    %639 = vmatprep.subr.bf16.mxu0 0
    %640 = vmatpush1.bf16.msra.mxu0 0
    %641 = vmatprep.subr.bf16.mxu0 0
    %642 = vmatpush1.bf16.msra.mxu0 0
    %643 = vmatprep.subr.bf16.mxu0 0
    %644 = vmatpush1.bf16.msra.mxu0 0
    %645 = vmatprep.subr.bf16.mxu0 0
    %646 = vmatpush1.bf16.msra.mxu0 0
    %647 = vmatprep.subr.bf16.mxu0 0
    %648 = vmatpush1.bf16.msra.mxu0 0
    %649 = vmatprep.subr.bf16.mxu0 0
    %650 = vmatpush1.bf16.msra.mxu0 0
    %651 = vmatprep.subr.bf16.mxu0 0
    %652 = vmatpush1.bf16.msra.mxu0 0
    %653 = vmatprep.subr.bf16.mxu0 0
    %654 = vmatpush1.bf16.msra.mxu0 0
    %655 = vmatprep.subr.bf16.mxu0 0
    %656 = vmatpush1.bf16.msra.mxu0 0
    %657 = vmatprep.subr.bf16.mxu0 0
    %658 = vmatpush1.bf16.msra.mxu0 0
    %659 = vmatprep.mubr.bf16.mxu0 0
    %660 = vmatmul.mubr.bf16.gmra.mrb[0].mxu0 %v505
    %v661 = vpop.f32.mrb[0].mxu0
    %v662 = vadd.f32 %v622, %v661
    %v663 = vpop.f32.mrb[0].mxu0
    %v664 = vpop.f32.mrb[0].mxu0
    %v665 = vpop.f32.mrb[0].mxu0
    %666 = vdwg.mxu0
    %v667 = vmax.f32 %v662, 0.0
    %v668 = vpack.c.bf16 %v667, %v667
    %v669 = vld [vmem:[%s3] sm:$0xf]
    %v670 = vld [vmem:[%s3 + $0x4] sm:$0xf]
    %v671 = vld [vmem:[%s3 + $0x8] sm:$0xf]
    %v672 = vld [vmem:[%s3 + $0xc] sm:$0xf]
    %v673 = vld [vmem:[%s3 + $0x10] sm:$0xf]
    %v674 = vld [vmem:[%s3 + $0x14] sm:$0xf]
    %v675 = vld [vmem:[%s3 + $0x18] sm:$0xf]
    %v676 = vld [vmem:[%s3 + $0x1c] sm:$0xf]
    %v677 = vld [vmem:[%s3 + $0x20] sm:$0xf]
    %v678 = vld [vmem:[%s3 + $0x24] sm:$0xf]
    %v679 = vld [vmem:[%s3 + $0x28] sm:$0xf]
    %v680 = vld [vmem:[%s3 + $0x2c] sm:$0xf]
    %v681 = vld [vmem:[%s3 + $0x30] sm:$0xf]
    %v682 = vld [vmem:[%s3 + $0x34] sm:$0xf]
    %v683 = vld [vmem:[%s3 + $0x38] sm:$0xf]
    %v684 = vld [vmem:[%s3 + $0x3c] sm:$0xf]
    %v685 = vld [vmem:[%s4] sm:$0x1]
    %v687 = vlaneseq
    %v688 = vshrl.u32 %v687, 7
    %v689 = vsub.s32 0, %v688
    %v690 = vrot.slane %v685, %v689
    %v708 = vunpack.c.l.b16 %v669
    %v709 = vunpack.c.l.b16 %v670
    %v710 = vunpack.c.l.b16 %v671
    %v711 = vunpack.c.l.b16 %v672
    %v712 = vunpack.c.l.b16 %v673
    %v713 = vunpack.c.l.b16 %v674
    %v714 = vunpack.c.l.b16 %v675
    %v715 = vunpack.c.l.b16 %v676
    %v716 = vunpack.c.l.b16 %v677
    %v717 = vunpack.c.l.b16 %v678
    %v718 = vunpack.c.l.b16 %v679
    %v719 = vunpack.c.l.b16 %v680
    %v720 = vunpack.c.l.b16 %v681
    %v721 = vunpack.c.l.b16 %v682
    %v722 = vunpack.c.l.b16 %v683
    %v723 = vunpack.c.l.b16 %v684
    %v724 = vpack.c.b16 %v709, %v708
    %v725 = vpack.c.b16 %v711, %v710
    %v726 = vpack.c.b16 %v713, %v712
    %v727 = vpack.c.b16 %v715, %v714
    %v728 = vpack.c.b16 %v717, %v716
    %v729 = vpack.c.b16 %v719, %v718
    %v730 = vpack.c.b16 %v721, %v720
    %v731 = vpack.c.b16 %v723, %v722
    %740 = vmatprep.subr.bf16.mxu0 0
    %741 = vmatpush1.bf16.msra.mxu0 %v724
    %742 = vmatprep.subr.bf16.mxu0 0
    %743 = vmatpush1.bf16.msra.mxu0 %v725
    %744 = vmatprep.subr.bf16.mxu0 0
    %745 = vmatpush1.bf16.msra.mxu0 %v726
    %746 = vmatprep.subr.bf16.mxu0 0
    %747 = vmatpush1.bf16.msra.mxu0 %v727
    %748 = vmatprep.subr.bf16.mxu0 0
    %749 = vmatpush1.bf16.msra.mxu0 %v728
    %750 = vmatprep.subr.bf16.mxu0 0
    %751 = vmatpush1.bf16.msra.mxu0 %v729
    %752 = vmatprep.subr.bf16.mxu0 0
    %753 = vmatpush1.bf16.msra.mxu0 %v730
    %754 = vmatprep.subr.bf16.mxu0 0
    %755 = vmatpush1.bf16.msra.mxu0 %v731
    %756 = vmatprep.subr.bf16.mxu0 0
    %757 = vmatpush1.bf16.msra.mxu0 0
    %758 = vmatprep.subr.bf16.mxu0 0
    %759 = vmatpush1.bf16.msra.mxu0 0
    %760 = vmatprep.subr.bf16.mxu0 0
    %761 = vmatpush1.bf16.msra.mxu0 0
    %762 = vmatprep.subr.bf16.mxu0 0
    %763 = vmatpush1.bf16.msra.mxu0 0
    %764 = vmatprep.subr.bf16.mxu0 0
    %765 = vmatpush1.bf16.msra.mxu0 0
    %766 = vmatprep.subr.bf16.mxu0 0
    %767 = vmatpush1.bf16.msra.mxu0 0
    %768 = vmatprep.subr.bf16.mxu0 0
    %769 = vmatpush1.bf16.msra.mxu0 0
    %770 = vmatprep.subr.bf16.mxu0 0
    %771 = vmatpush1.bf16.msra.mxu0 0
    %772 = vmatprep.mubr.bf16.mxu0 0
    %773 = vmatmul.mubr.bf16.gmra.mrb[0].mxu0 %v668
    %v774 = vpop.f32.mrb[0].mxu0
    %v775 = vadd.f32 %v690, %v774
    %v776 = vpop.f32.mrb[0].mxu0
    %v777 = vpop.f32.mrb[0].mxu0
    %v778 = vpop.f32.mrb[0].mxu0
    %779 = vdwg.mxu0
    %v780 = vmax.f32 %v775, 0.0
    %v781 = vpack.c.bf16 %v780, %v780
    %v782 = vld [vmem:[%s5] sm:$0xf]
    %v783 = vld [vmem:[%s5 + $0x4] sm:$0xf]
    %v784 = vld [vmem:[%s5 + $0x8] sm:$0xf]
    %v785 = vld [vmem:[%s5 + $0xc] sm:$0xf]
    %v786 = vld [vmem:[%s5 + $0x10] sm:$0xf]
    %v787 = vld [vmem:[%s5 + $0x14] sm:$0xf]
    %v788 = vld [vmem:[%s5 + $0x18] sm:$0xf]
    %v789 = vld [vmem:[%s5 + $0x1c] sm:$0xf]
    %v790 = vld [vmem:[%s5 + $0x20] sm:$0xf]
    %v791 = vld [vmem:[%s5 + $0x24] sm:$0xf]
    %v792 = vld [vmem:[%s5 + $0x28] sm:$0xf]
    %v793 = vld [vmem:[%s5 + $0x2c] sm:$0xf]
    %v794 = vld [vmem:[%s5 + $0x30] sm:$0xf]
    %v795 = vld [vmem:[%s5 + $0x34] sm:$0xf]
    %v796 = vld [vmem:[%s5 + $0x38] sm:$0xf]
    %v797 = vld [vmem:[%s5 + $0x3c] sm:$0xf]
    %v798 = vld [vmem:[%s6] sm:$0x1]
    %v800 = vlaneseq
    %v801 = vshrl.u32 %v800, 7
    %v802 = vsub.s32 0, %v801
    %v803 = vrot.slane %v798, %v802
    %v821 = vunpack.c.l.b16 %v782
    %v822 = vunpack.c.l.b16 %v783
    %v823 = vunpack.c.l.b16 %v784
    %v824 = vunpack.c.l.b16 %v785
    %v825 = vunpack.c.l.b16 %v786
    %v826 = vunpack.c.l.b16 %v787
    %v827 = vunpack.c.l.b16 %v788
    %v828 = vunpack.c.l.b16 %v789
    %v829 = vunpack.c.l.b16 %v790
    %v830 = vunpack.c.l.b16 %v791
    %v831 = vunpack.c.l.b16 %v792
    %v832 = vunpack.c.l.b16 %v793
    %v833 = vunpack.c.l.b16 %v794
    %v834 = vunpack.c.l.b16 %v795
    %v835 = vunpack.c.l.b16 %v796
    %v836 = vunpack.c.l.b16 %v797
    %v837 = vpack.c.b16 %v822, %v821
    %v838 = vpack.c.b16 %v824, %v823
    %v839 = vpack.c.b16 %v826, %v825
    %v840 = vpack.c.b16 %v828, %v827
    %v841 = vpack.c.b16 %v830, %v829
    %v842 = vpack.c.b16 %v832, %v831
    %v843 = vpack.c.b16 %v834, %v833
    %v844 = vpack.c.b16 %v836, %v835
    %853 = vmatprep.subr.bf16.mxu0 0
    %854 = vmatpush1.bf16.msra.mxu0 %v837
    %855 = vmatprep.subr.bf16.mxu0 0
    %856 = vmatpush1.bf16.msra.mxu0 %v838
    %857 = vmatprep.subr.bf16.mxu0 0
    %858 = vmatpush1.bf16.msra.mxu0 %v839
    %859 = vmatprep.subr.bf16.mxu0 0
    %860 = vmatpush1.bf16.msra.mxu0 %v840
    %861 = vmatprep.subr.bf16.mxu0 0
    %862 = vmatpush1.bf16.msra.mxu0 %v841
    %863 = vmatprep.subr.bf16.mxu0 0
    %864 = vmatpush1.bf16.msra.mxu0 %v842
    %865 = vmatprep.subr.bf16.mxu0 0
    %866 = vmatpush1.bf16.msra.mxu0 %v843
    %867 = vmatprep.subr.bf16.mxu0 0
    %868 = vmatpush1.bf16.msra.mxu0 %v844
    %869 = vmatprep.subr.bf16.mxu0 0
    %870 = vmatpush1.bf16.msra.mxu0 0
    %871 = vmatprep.subr.bf16.mxu0 0
    %872 = vmatpush1.bf16.msra.mxu0 0
    %873 = vmatprep.subr.bf16.mxu0 0
    %874 = vmatpush1.bf16.msra.mxu0 0
    %875 = vmatprep.subr.bf16.mxu0 0
    %876 = vmatpush1.bf16.msra.mxu0 0
    %877 = vmatprep.subr.bf16.mxu0 0
    %878 = vmatpush1.bf16.msra.mxu0 0
    %879 = vmatprep.subr.bf16.mxu0 0
    %880 = vmatpush1.bf16.msra.mxu0 0
    %881 = vmatprep.subr.bf16.mxu0 0
    %882 = vmatpush1.bf16.msra.mxu0 0
    %883 = vmatprep.subr.bf16.mxu0 0
    %884 = vmatpush1.bf16.msra.mxu0 0
    %885 = vmatprep.mubr.bf16.mxu0 0
    %886 = vmatmul.mubr.bf16.gmra.mrb[0].mxu0 %v781
    %v887 = vpop.f32.mrb[0].mxu0
    %v888 = vadd.f32 %v803, %v887
    %v889 = vpop.f32.mrb[0].mxu0
    %v890 = vpop.f32.mrb[0].mxu0
    %v891 = vpop.f32.mrb[0].mxu0
    %892 = vdwg.mxu0
    %v893 = vmax.f32 %v888, 0.0
    %v894 = vpack.c.bf16 %v893, %v893
    %v895 = vld [vmem:[%s7] sm:$0xf]
    %v896 = vld [vmem:[%s7 + $0x4] sm:$0xf]
    %v897 = vld [vmem:[%s7 + $0x8] sm:$0xf]
    %v898 = vld [vmem:[%s7 + $0xc] sm:$0xf]
    %v899 = vld [vmem:[%s7 + $0x10] sm:$0xf]
    %v900 = vld [vmem:[%s7 + $0x14] sm:$0xf]
    %v901 = vld [vmem:[%s7 + $0x18] sm:$0xf]
    %v902 = vld [vmem:[%s7 + $0x1c] sm:$0xf]
    %v903 = vld [vmem:[%s8] sm:$0x1]
    %v905 = vlaneseq
    %v906 = vshrl.u32 %v905, 7
    %v907 = vsub.s32 0, %v906
    %v908 = vrot.slane %v903, %v907
    %v918 = vunpack.c.l.b16 %v895
    %v919 = vunpack.c.l.b16 %v896
    %v920 = vunpack.c.l.b16 %v897
    %v921 = vunpack.c.l.b16 %v898
    %v922 = vunpack.c.l.b16 %v899
    %v923 = vunpack.c.l.b16 %v900
    %v924 = vunpack.c.l.b16 %v901
    %v925 = vunpack.c.l.b16 %v902
    %v926 = vpack.c.b16 %v919, %v918
    %v927 = vpack.c.b16 %v921, %v920
    %v928 = vpack.c.b16 %v923, %v922
    %v929 = vpack.c.b16 %v925, %v924
    %vm934 = vcmask 523264
    %v936 = vsel %vm934, %v894, 0
    %938 = vmatprep.subr.bf16.mxu0 0
    %939 = vmatpush1.bf16.msra.mxu0 %v926
    %940 = vmatprep.subr.bf16.mxu0 0
    %941 = vmatpush1.bf16.msra.mxu0 %v927
    %942 = vmatprep.subr.bf16.mxu0 0
    %943 = vmatpush1.bf16.msra.mxu0 %v928
    %944 = vmatprep.subr.bf16.mxu0 0
    %945 = vmatpush1.bf16.msra.mxu0 %v929
    %946 = vmatprep.subr.bf16.mxu0 0
    %947 = vmatpush1.bf16.msra.mxu0 0
    %948 = vmatprep.subr.bf16.mxu0 0
    %949 = vmatpush1.bf16.msra.mxu0 0
    %950 = vmatprep.subr.bf16.mxu0 0
    %951 = vmatpush1.bf16.msra.mxu0 0
    %952 = vmatprep.subr.bf16.mxu0 0
    %953 = vmatpush1.bf16.msra.mxu0 0
    %954 = vmatprep.subr.bf16.mxu0 0
    %955 = vmatpush1.bf16.msra.mxu0 0
    %956 = vmatprep.subr.bf16.mxu0 0
    %957 = vmatpush1.bf16.msra.mxu0 0
    %958 = vmatprep.subr.bf16.mxu0 0
    %959 = vmatpush1.bf16.msra.mxu0 0
    %960 = vmatprep.subr.bf16.mxu0 0
    %961 = vmatpush1.bf16.msra.mxu0 0
    %962 = vmatprep.subr.bf16.mxu0 0
    %963 = vmatpush1.bf16.msra.mxu0 0
    %964 = vmatprep.subr.bf16.mxu0 0
    %965 = vmatpush1.bf16.msra.mxu0 0
    %966 = vmatprep.subr.bf16.mxu0 0
    %967 = vmatpush1.bf16.msra.mxu0 0
    %968 = vmatprep.subr.bf16.mxu0 0
    %969 = vmatpush1.bf16.msra.mxu0 0
    %970 = vmatprep.mubr.bf16.mxu0 0
    %971 = vmatmul.mubr.bf16.gmra.mrb[0].mxu0 %v936
    %v972 = vpop.f32.mrb[0].mxu0
    %v973 = vadd.f32 %v908, %v972
    %v974 = vpop.f32.mrb[0].mxu0
    %v975 = vpop.f32.mrb[0].mxu0
    %v976 = vpop.f32.mrb[0].mxu0
    %977 = vdwg.mxu0
    %vm978 = vcmask 74752
    %979 = vst.msk [vmem:[#allocation5] sm:$0x3] %vm978, %v973
    // Predicated region
    $region42: #{mlp_forward.1} parent=1 // pred_check
      _
    $region43: #{mlp_forward.1} parent=1 // pred_check_branch
      %981 = sbr.rel (0) target = $region45
    $region44: #{mlp_forward.1} parent=1 // pred_region
      %s983 = ssub.s32 32, 32
      %984 = vsyncadd [#allocation4], %s983
      %s986 = sshll.u32 [#allocation5], 4
      %s987 = int_to_ptr.vmem [resolvable:$true] %s986
      %989 = dma.vmem_to_hbm [thread:$0]  %s987, 32, %s9, [#allocation4]
    $region45: #{mlp_forward.1} parent=1 // pred_fallthru
      _
    // Predicated region
    $region46: #{mlp_forward.1} parent=1 // pred_check
      _
    $region47: #{mlp_forward.1} parent=1 // pred_check_branch
      %991 = sbr.rel (0) target = $region49
    $region48: #{mlp_forward.1} parent=1 // pred_region
      %992 = dma.done [#allocation4], 32
    $region49: #{mlp_forward.1} parent=1 // pred_fallthru
      _
    %993 = vsyncpa [#allocation3], 1
    %994 = vsyncpa [#allocation4], 1

</llo_original>
